<compile_context>
chip_gen: v6e
topology: v6e:2x2x1
jax: 0.10.0
libtpu: 0.0.40
codegen_flags: <defaults>
</compile_context>

<pallas_src>
from functools import partial

import jax
import jax.numpy as jnp
from jax.experimental import pallas as pl
from jax.experimental.pallas import tpu as pltpu

EPS = 1e-5
VMEM_LIMIT = 32 * 1024 * 1024      # safe scoped limit on v5e/v6e (128 MiB) and v7x (64 MiB)
FUSED_MAX_BYTES = 4 * 1024 * 1024  # take the 1-read/1-write fused path below this


def _round_up(v, m):
    return ((v + m - 1) // m) * m


# ---------------------------------------------------------------------------
# Fused single-pass kernel: whole (NT, C, S) slab resident in VMEM.
# ---------------------------------------------------------------------------
def _fused_kernel(x_ref, scale_ref, shift_ref, o_ref, *, count):
    x = x_ref[...].astype(jnp.float32)                            # (NT, C, S)
    s1 = jnp.sum(jnp.sum(x, axis=2, keepdims=True), axis=0, keepdims=True)
    s2 = jnp.sum(jnp.sum(x * x, axis=2, keepdims=True), axis=0, keepdims=True)
    mean = s1 / count                                             # (1, C, 1)
    # TODO(synk): E[x^2]-mean^2 in f32 can lose precision for very large
    # N*T*H*W or strongly non-zero-mean inputs (matches BN's fast path).
    var = s2 / count - mean * mean                                # biased var (training BN)
    rstd = jax.lax.rsqrt(var + EPS)                               # (1, C, 1)
    a = rstd * scale_ref[...]                                     # (NT, C, 1) = rstd*gamma*p
    b = shift_ref[...] - mean * a                                 # (NT, C, 1)
    o_ref[...] = (x * a + b).astype(o_ref.dtype)


# ---------------------------------------------------------------------------
# Two-pass path kernels (used when the slab does not fit in VMEM).
# ---------------------------------------------------------------------------
def _stats_kernel(x_ref, mean_ref, rstd_ref, sum_scr, sq_scr, *, count):
    """Accumulate per-channel sum / sum-of-squares across both grid axes."""
    i = pl.program_id(0)
    j = pl.program_id(1)
    is_first = jnp.logical_and(i == 0, j == 0)
    is_last = jnp.logical_and(i == pl.num_programs(0) - 1,
                              j == pl.num_programs(1) - 1)

    @pl.when(is_first)
    def _():
        sum_scr[...] = jnp.zeros_like(sum_scr)
        sq_scr[...] = jnp.zeros_like(sq_scr)

    x = x_ref[...].astype(jnp.float32)              # (bnt, C, bs)
    s1 = jnp.sum(x, axis=2, keepdims=True)          # lane reduce -> (bnt, C, 1)
    s2 = jnp.sum(x * x, axis=2, keepdims=True)
    sum_scr[...] += jnp.sum(s1, axis=0)             # (C, 1)
    sq_scr[...] += jnp.sum(s2, axis=0)

    @pl.when(is_last)
    def _():
        mean = sum_scr[...] / count
        var = sq_scr[...] / count - mean * mean     # biased variance (training BN)
        mean_ref[...] = mean
        rstd_ref[...] = jax.lax.rsqrt(var + EPS)


def _apply_kernel(x_ref, scale_ref, shift_ref, o_ref):
    """y = x * scale + shift  (scale/shift broadcast across the lane axis)."""
    x = x_ref[...].astype(jnp.float32)              # (bnt, C, bs)
    y = x * scale_ref[...] + shift_ref[...]         # (bnt, C, 1) broadcasts over lanes
    o_ref[...] = y.astype(o_ref.dtype)


def _pick_blocks(NT, C, S, target_bytes=4 << 20):
    """Block sizes that exactly divide (NT, S), are lane-dense, and fit VMEM.

    VMEM footprint accounts for sublane padding of C and the lane-padded
    (bnt, C, 1) scale/shift blocks of the apply pass.
    """
    c_pad = _round_up(max(C, 8), 8)
    if S % 128 == 0:
        cap = max(128, target_bytes // (4 * c_pad))
        bs = 128
        for d in range(128, S + 1, 128):
            if S % d == 0 and d <= cap:
                bs = d
    else:
        bs = S  # block must equal the full dim when S is not 128-aligned
    bnt = 1
    for d in range(1, NT + 1):
        if NT % d == 0 and d * c_pad * (bs + 256) * 4 <= target_bytes:
            bnt = d
    return bnt, bs


def tebn_forward(x, gamma, beta, p, *, force_two_pass=False):
    """x: (N, T, C, H, W); gamma, beta: (C,); p: (T,). Returns (N, T, C, H, W)."""
    N, T, C, H, W = x.shape
    NT, S = N * T, H * W
    xr = x.reshape(NT, C, S)                 # free reshape of contiguous NTCHW

    # Fold gamma/beta with the per-timestep p into per-(row, channel) arrays.
    pf = p.astype(jnp.float32)
    gf = gamma.astype(jnp.float32)
    bf = beta.astype(jnp.float32)
    gp_tc = gf[None, :] * pf[:, None]                              # (T, C) = gamma * p_t
    bp_tc = bf[None, :] * pf[:, None]                              # (T, C) = beta  * p_t
    gp = jnp.broadcast_to(gp_tc[None], (N, T, C)).reshape(NT, C, 1)
    bp = jnp.broadcast_to(bp_tc[None], (N, T, C)).reshape(NT, C, 1)

    c_pad = _round_up(max(C, 8), 8)
    fused_bytes = NT * c_pad * _round_up(S, 128) * 4
    if (not force_two_pass) and fused_bytes <= FUSED_MAX_BYTES:
        # Single-pass fused kernel: 1 HBM read + 1 HBM write.
        yr = pl.pallas_call(
            partial(_fused_kernel, count=float(NT * S)),
            out_shape=jax.ShapeDtypeStruct((NT, C, S), x.dtype),
            compiler_params=pltpu.CompilerParams(vmem_limit_bytes=VMEM_LIMIT),
        )(xr, gp, bp)
        return yr.reshape(N, T, C, H, W)

    # -------------------- Two-pass path --------------------
    bnt, bs = _pick_blocks(NT, C, S)
    grid = (NT // bnt, S // bs)

    # Pass 1: per-channel mean / rstd over (N, T, H, W).
    mean, rstd = pl.pallas_call(
        partial(_stats_kernel, count=float(NT * S)),
        out_shape=(jax.ShapeDtypeStruct((C, 1), jnp.float32),
                   jax.ShapeDtypeStruct((C, 1), jnp.float32)),
        grid_spec=pltpu.PrefetchScalarGridSpec(
            num_scalar_prefetch=0,
            grid=grid,
            in_specs=[pl.BlockSpec((bnt, C, bs), lambda i, j: (i, 0, j))],
            out_specs=[pl.BlockSpec((C, 1), lambda i, j: (0, 0)),
                       pl.BlockSpec((C, 1), lambda i, j: (0, 0))],
            scratch_shapes=[pltpu.VMEM((C, 1), jnp.float32),
                            pltpu.VMEM((C, 1), jnp.float32)]),
        compiler_params=pltpu.CompilerParams(
            dimension_semantics=("arbitrary", "arbitrary"),
            vmem_limit_bytes=VMEM_LIMIT),
    )(xr)

    # Fold stats with gamma*p / beta*p into per-(row, channel) scale/shift (tiny).
    scale = gp * rstd[None]                  # (NT, C, 1)
    shift = bp - mean[None] * scale          # (NT, C, 1)

    # Pass 2: lane-dense elementwise y = x*scale + shift (both axes parallel).
    yr = pl.pallas_call(
        _apply_kernel,
        out_shape=jax.ShapeDtypeStruct((NT, C, S), x.dtype),
        grid_spec=pltpu.PrefetchScalarGridSpec(
            num_scalar_prefetch=0,
            grid=grid,
            in_specs=[pl.BlockSpec((bnt, C, bs), lambda i, j: (i, 0, j)),
                      pl.BlockSpec((bnt, C, 1), lambda i, j: (i, 0, 0)),
                      pl.BlockSpec((bnt, C, 1), lambda i, j: (i, 0, 0))],
            out_specs=pl.BlockSpec((bnt, C, bs), lambda i, j: (i, 0, j))),
        compiler_params=pltpu.CompilerParams(
            dimension_semantics=("parallel", "parallel"),
            vmem_limit_bytes=VMEM_LIMIT),
    )(xr, scale, shift)

    return yr.reshape(N, T, C, H, W)


def tebn_reference(x, gamma, beta, p):
    """Pure-JAX reference matching the PyTorch TEBN.forward (training-mode BN)."""
    mean = jnp.mean(x, axis=(0, 1, 3, 4), keepdims=True)
    var = jnp.mean((x - mean) ** 2, axis=(0, 1, 3, 4), keepdims=True)
    y = (x - mean) / jnp.sqrt(var + EPS)
    y = y * gamma[None, None, :, None, None] + beta[None, None, :, None, None]
    return y * p[None, :, None, None, None]


if __name__ == "__main__":
    key = jax.random.PRNGKey(0)
    k1, k2, k3, k4 = jax.random.split(key, 4)

    # Small shapes consistent with the module: p has T=4 timesteps.
    N, T, C, H, W = 2, 4, 4, 16, 16
    x = jax.random.normal(k1, (N, T, C, H, W), dtype=jnp.float32)
    # Module __init__ uses ones/zeros; use non-trivial deterministic values so
    # the math is exercised.
    gamma = 1.0 + 0.1 * jax.random.normal(k2, (C,), dtype=jnp.float32)  # bn.weight
    beta = 0.1 * jax.random.normal(k3, (C,), dtype=jnp.float32)         # bn.bias
    p = 1.0 + 0.1 * jax.random.normal(k4, (T,), dtype=jnp.float32)      # self.p

    ref = tebn_reference(x, gamma, beta, p)

    # Fused single-pass path (small input fits in VMEM).
    out_fused = jax.block_until_ready(tebn_forward(x, gamma, beta, p))
    assert out_fused.shape == ref.shape == (N, T, C, H, W)
    err_f = float(jnp.max(jnp.abs(out_fused - ref)))
    assert jnp.allclose(out_fused, ref, atol=1e-4, rtol=1e-4), f"fused max_err={err_f}"

    # Tiled two-pass path (used for large inputs); exercised here for coverage.
    out_tiled = jax.block_until_ready(
        tebn_forward(x, gamma, beta, p, force_two_pass=True))
    err_t = float(jnp.max(jnp.abs(out_tiled - ref)))
    assert jnp.allclose(out_tiled, ref, atol=1e-4, rtol=1e-4), f"two-pass max_err={err_t}"

    print("KERNEL_OK")
</pallas_src>

<mosaic_0001>
module attributes {stable_mosaic.version = 11 : i64} {
  func.func @_fused_kernel(%arg0: memref<8x4x256xf32, #tpu.memory_space<vmem>>, %arg1: memref<8x4x1xf32, #tpu.memory_space<vmem>>, %arg2: memref<8x4x1xf32, #tpu.memory_space<vmem>>, %arg3: memref<8x4x256xf32, #tpu.memory_space<vmem>>) attributes {dimension_semantics = [], scalar_prefetch = 0 : i64, scratch_operands = 0 : i64, tpu.core_type = #tpu.core_type<tc>} {
    %c0 = arith.constant 0 : index
    %c0_0 = arith.constant 0 : index
    %c0_1 = arith.constant 0 : index
    %0 = vector.load %arg0[%c0, %c0_0, %c0_1] : memref<8x4x256xf32, #tpu.memory_space<vmem>>, vector<8x4x256xf32>
    %cst = arith.constant dense<0.000000e+00> : vector<8x4xf32>
    %1 = vector.multi_reduction <add>, %0, %cst [2] : vector<8x4x256xf32> to vector<8x4xf32>
    %2 = vector.shape_cast %1 : vector<8x4xf32> to vector<8x4x1xf32>
    %cst_2 = arith.constant dense<0.000000e+00> : vector<4x1xf32>
    %3 = vector.multi_reduction <add>, %2, %cst_2 [0] : vector<8x4x1xf32> to vector<4x1xf32>
    %4 = vector.shape_cast %3 : vector<4x1xf32> to vector<1x4x1xf32>
    %5 = arith.mulf %0, %0 : vector<8x4x256xf32>
    %cst_3 = arith.constant dense<0.000000e+00> : vector<8x4xf32>
    %6 = vector.multi_reduction <add>, %5, %cst_3 [2] : vector<8x4x256xf32> to vector<8x4xf32>
    %7 = vector.shape_cast %6 : vector<8x4xf32> to vector<8x4x1xf32>
    %cst_4 = arith.constant dense<0.000000e+00> : vector<4x1xf32>
    %8 = vector.multi_reduction <add>, %7, %cst_4 [0] : vector<8x4x1xf32> to vector<4x1xf32>
    %9 = vector.shape_cast %8 : vector<4x1xf32> to vector<1x4x1xf32>
    %cst_5 = arith.constant 2.048000e+03 : f32
    %10 = vector.broadcast %cst_5 : f32 to vector<1x4x1xf32>
    %11 = arith.divf %4, %10 : vector<1x4x1xf32>
    %cst_6 = arith.constant 2.048000e+03 : f32
    %12 = vector.broadcast %cst_6 : f32 to vector<1x4x1xf32>
    %13 = arith.divf %9, %12 : vector<1x4x1xf32>
    %14 = arith.mulf %11, %11 : vector<1x4x1xf32>
    %15 = arith.subf %13, %14 : vector<1x4x1xf32>
    %cst_7 = arith.constant 9.99999974E-6 : f32
    %16 = vector.broadcast %cst_7 : f32 to vector<1x4x1xf32>
    %17 = arith.addf %15, %16 : vector<1x4x1xf32>
    %18 = math.rsqrt %17 : vector<1x4x1xf32>
    %c0_8 = arith.constant 0 : index
    %c0_9 = arith.constant 0 : index
    %c0_10 = arith.constant 0 : index
    %19 = vector.load %arg1[%c0_8, %c0_9, %c0_10] : memref<8x4x1xf32, #tpu.memory_space<vmem>>, vector<8x4x1xf32>
    %20 = vector.broadcast %18 : vector<1x4x1xf32> to vector<8x4x1xf32>
    %21 = arith.mulf %20, %19 : vector<8x4x1xf32>
    %c0_11 = arith.constant 0 : index
    %c0_12 = arith.constant 0 : index
    %c0_13 = arith.constant 0 : index
    %22 = vector.load %arg2[%c0_11, %c0_12, %c0_13] : memref<8x4x1xf32, #tpu.memory_space<vmem>>, vector<8x4x1xf32>
    %23 = vector.broadcast %11 : vector<1x4x1xf32> to vector<8x4x1xf32>
    %24 = arith.mulf %23, %21 : vector<8x4x1xf32>
    %25 = arith.subf %22, %24 : vector<8x4x1xf32>
    %26 = vector.broadcast %21 : vector<8x4x1xf32> to vector<8x4x256xf32>
    %27 = arith.mulf %0, %26 : vector<8x4x256xf32>
    %28 = vector.broadcast %25 : vector<8x4x1xf32> to vector<8x4x256xf32>
    %29 = arith.addf %27, %28 : vector<8x4x256xf32>
    %c0_14 = arith.constant 0 : index
    %c0_15 = arith.constant 0 : index
    %c0_16 = arith.constant 0 : index
    %30 = vector.load %arg3[%c0_14, %c0_15, %c0_16] : memref<8x4x256xf32, #tpu.memory_space<vmem>>, vector<8x4x256xf32>
    tpu.vector_store %arg3[%c0_14, %c0_15, %c0_16], %29 {strides = array<i32>} : memref<8x4x256xf32, #tpu.memory_space<vmem>>, vector<8x4x256xf32>,
    return
  }
}

</mosaic_0001>

<llo_original>
// kernel: tpu_custom_call.1
$region0: #{tpu_custom_call.1}
  #allocation0 [shape = 'u32[]', space=smem, size = 0x4, offset = 0x4, fixed_abs, tag = 'smem constant byte address 0x4 - core index']
  #allocation1 [shape = 'u32[144,128]{1,0:T(1,128)}', space=vmem, size = 0x12000, scoped, tag = 'internal scratch']
  %s0 = inlined_call_operand.vmem [shape: f32[8,4,256], index: 0, kind: input, shape index: {}]
  %s1 = inlined_call_operand.vmem [shape: f32[8,4,1], index: 1, kind: input, shape index: {}]
  %s2 = inlined_call_operand.vmem [shape: f32[8,4,1], index: 2, kind: input, shape index: {}]
  %s3 = inlined_call_operand.hbm [shape: f32[8,4,256], index: 3, kind: output, shape index: {}]
  %s4 = sld [smem:[#allocation0]]
  $region22: #{tpu_custom_call.1} parent=0
    _
  %s6 = ssub.s32 1, %s4
  %s7 = scalar_select 0, %s6, %s4
  $region1: #{tpu_custom_call.1} parent=0
    #allocation2 [shape = 'u8[32768]{0}', space=vmem, size = 0x8000, scoped, tag = 'output window, operand 0, single buffered']
    #allocation3 [shape = 's32[1]{0}', space=sflag, size = 0x4, scoped, tag = 'scoped memory for tpu_custom_call.1']
    %8 = vsyncpa [#allocation3], 0
    // Predicated region
    $region2: #{tpu_custom_call.1} parent=1 // pred_check
      _
    $region3: #{tpu_custom_call.1} parent=1 // pred_check_branch
      %10 = sbr.rel (0) target = $region5
    $region4: #{tpu_custom_call.1} parent=1 // pred_region
      _
    $region5: #{tpu_custom_call.1} parent=1 // pred_fallthru
      _
    // Predicated region
    $region6: #{tpu_custom_call.1} parent=1 // pred_check
      _
    $region7: #{tpu_custom_call.1} parent=1 // pred_check_branch
      %12 = sbr.rel (0) target = $region9
    $region8: #{tpu_custom_call.1} parent=1 // pred_region
      _
    $region9: #{tpu_custom_call.1} parent=1 // pred_fallthru
      _
    // Predicated region
    $region10: #{tpu_custom_call.1} parent=1 // pred_check
      _
    $region11: #{tpu_custom_call.1} parent=1 // pred_check_branch
      %14 = sbr.rel (0) target = $region13
    $region12: #{tpu_custom_call.1} parent=1 // pred_region
      _
    $region13: #{tpu_custom_call.1} parent=1 // pred_fallthru
      _
    %v15 = vld [vmem:[%s0] sm:$0xff]
    %v16 = vld [vmem:[%s0 + $0x8] sm:$0xff]
    %v17 = vld [vmem:[%s0 + $0x10] sm:$0xff]
    %v18 = vld [vmem:[%s0 + $0x18] sm:$0xff]
    %v19 = vld [vmem:[%s0 + $0x20] sm:$0xff]
    %v20 = vld [vmem:[%s0 + $0x28] sm:$0xff]
    %v21 = vld [vmem:[%s0 + $0x30] sm:$0xff]
    %v22 = vld [vmem:[%s0 + $0x38] sm:$0xff]
    %v31 = vcombine.high %v15, %v15
    %v32 = vcombine.high %v16, %v16
    %v33 = vcombine.high %v17, %v17
    %v34 = vcombine.high %v18, %v18
    %v35 = vcombine.high %v19, %v19
    %v36 = vcombine.high %v20, %v20
    %v37 = vcombine.high %v21, %v21
    %v38 = vcombine.high %v22, %v22
    %vm47 = vcmask 1043456
    %v48 = vsel %vm47, %v15, 0.0
    %v49 = vsel %vm47, %v31, 0.0
    %v50 = vadd.f32 %v48, %v49
    %51 = vadd.xlane.f32.xlu0 %v50
    %v52 = vpop.xlane.xlu0 %51
    %v53 = vsel %vm47, %v16, 0.0
    %v54 = vsel %vm47, %v32, 0.0
    %v55 = vadd.f32 %v53, %v54
    %56 = vadd.xlane.f32.xlu0 %v55
    %v57 = vpop.xlane.xlu0 %56
    %v58 = vsel %vm47, %v17, 0.0
    %v59 = vsel %vm47, %v33, 0.0
    %v60 = vadd.f32 %v58, %v59
    %61 = vadd.xlane.f32.xlu0 %v60
    %v62 = vpop.xlane.xlu0 %61
    %v63 = vsel %vm47, %v18, 0.0
    %v64 = vsel %vm47, %v34, 0.0
    %v65 = vadd.f32 %v63, %v64
    %66 = vadd.xlane.f32.xlu0 %v65
    %v67 = vpop.xlane.xlu0 %66
    %v68 = vsel %vm47, %v19, 0.0
    %v69 = vsel %vm47, %v35, 0.0
    %v70 = vadd.f32 %v68, %v69
    %71 = vadd.xlane.f32.xlu0 %v70
    %v72 = vpop.xlane.xlu0 %71
    %v73 = vsel %vm47, %v20, 0.0
    %v74 = vsel %vm47, %v36, 0.0
    %v75 = vadd.f32 %v73, %v74
    %76 = vadd.xlane.f32.xlu0 %v75
    %v77 = vpop.xlane.xlu0 %76
    %v78 = vsel %vm47, %v21, 0.0
    %v79 = vsel %vm47, %v37, 0.0
    %v80 = vadd.f32 %v78, %v79
    %81 = vadd.xlane.f32.xlu0 %v80
    %v82 = vpop.xlane.xlu0 %81
    %v83 = vsel %vm47, %v22, 0.0
    %v84 = vsel %vm47, %v38, 0.0
    %v85 = vadd.f32 %v83, %v84
    %86 = vadd.xlane.f32.xlu0 %v85
    %v87 = vpop.xlane.xlu0 %86
    %v88 = vsel %vm47, %v52, 0.0
    %v89 = vsel %vm47, %v57, 0.0
    %v90 = vadd.f32 %v88, %v89
    %v91 = vsel %vm47, %v62, 0.0
    %v92 = vadd.f32 %v90, %v91
    %v93 = vsel %vm47, %v67, 0.0
    %v94 = vadd.f32 %v92, %v93
    %v95 = vsel %vm47, %v72, 0.0
    %v96 = vadd.f32 %v94, %v95
    %v97 = vsel %vm47, %v77, 0.0
    %v98 = vadd.f32 %v96, %v97
    %v99 = vsel %vm47, %v82, 0.0
    %v100 = vadd.f32 %v98, %v99
    %v101 = vsel %vm47, %v87, 0.0
    %v102 = vadd.f32 %v100, %v101
    %v103 = vmul.f32 %v15, %v15
    %v104 = vmul.f32 %v16, %v16
    %v105 = vmul.f32 %v17, %v17
    %v106 = vmul.f32 %v18, %v18
    %v107 = vmul.f32 %v19, %v19
    %v108 = vmul.f32 %v20, %v20
    %v109 = vmul.f32 %v21, %v21
    %v110 = vmul.f32 %v22, %v22
    %v119 = vcombine.high %v103, %v103
    %v120 = vcombine.high %v104, %v104
    %v121 = vcombine.high %v105, %v105
    %v122 = vcombine.high %v106, %v106
    %v123 = vcombine.high %v107, %v107
    %v124 = vcombine.high %v108, %v108
    %v125 = vcombine.high %v109, %v109
    %v126 = vcombine.high %v110, %v110
    %v135 = vsel %vm47, %v103, 0.0
    %v136 = vsel %vm47, %v119, 0.0
    %v137 = vadd.f32 %v135, %v136
    %138 = vadd.xlane.f32.xlu0 %v137
    %v139 = vpop.xlane.xlu0 %138
    %v140 = vsel %vm47, %v104, 0.0
    %v141 = vsel %vm47, %v120, 0.0
    %v142 = vadd.f32 %v140, %v141
    %143 = vadd.xlane.f32.xlu0 %v142
    %v144 = vpop.xlane.xlu0 %143
    %v145 = vsel %vm47, %v105, 0.0
    %v146 = vsel %vm47, %v121, 0.0
    %v147 = vadd.f32 %v145, %v146
    %148 = vadd.xlane.f32.xlu0 %v147
    %v149 = vpop.xlane.xlu0 %148
    %v150 = vsel %vm47, %v106, 0.0
    %v151 = vsel %vm47, %v122, 0.0
    %v152 = vadd.f32 %v150, %v151
    %153 = vadd.xlane.f32.xlu0 %v152
    %v154 = vpop.xlane.xlu0 %153
    %v155 = vsel %vm47, %v107, 0.0
    %v156 = vsel %vm47, %v123, 0.0
    %v157 = vadd.f32 %v155, %v156
    %158 = vadd.xlane.f32.xlu0 %v157
    %v159 = vpop.xlane.xlu0 %158
    %v160 = vsel %vm47, %v108, 0.0
    %v161 = vsel %vm47, %v124, 0.0
    %v162 = vadd.f32 %v160, %v161
    %163 = vadd.xlane.f32.xlu0 %v162
    %v164 = vpop.xlane.xlu0 %163
    %v165 = vsel %vm47, %v109, 0.0
    %v166 = vsel %vm47, %v125, 0.0
    %v167 = vadd.f32 %v165, %v166
    %168 = vadd.xlane.f32.xlu0 %v167
    %v169 = vpop.xlane.xlu0 %168
    %v170 = vsel %vm47, %v110, 0.0
    %v171 = vsel %vm47, %v126, 0.0
    %v172 = vadd.f32 %v170, %v171
    %173 = vadd.xlane.f32.xlu0 %v172
    %v174 = vpop.xlane.xlu0 %173
    %v175 = vsel %vm47, %v139, 0.0
    %v176 = vsel %vm47, %v144, 0.0
    %v177 = vadd.f32 %v175, %v176
    %v178 = vsel %vm47, %v149, 0.0
    %v179 = vadd.f32 %v177, %v178
    %v180 = vsel %vm47, %v154, 0.0
    %v181 = vadd.f32 %v179, %v180
    %v182 = vsel %vm47, %v159, 0.0
    %v183 = vadd.f32 %v181, %v182
    %v184 = vsel %vm47, %v164, 0.0
    %v185 = vadd.f32 %v183, %v184
    %v186 = vsel %vm47, %v169, 0.0
    %v187 = vadd.f32 %v185, %v186
    %v188 = vsel %vm47, %v174, 0.0
    %v189 = vadd.f32 %v187, %v188
    %v190 = vrcp.pop 2048.0
    %v191 = vmul.f32 %v102, %v190
    %v192 = vmul.f32 %v189, %v190
    %v193 = vmul.f32 %v191, %v191
    %v194 = vsub.f32 %v192, %v193
    %v195 = vadd.f32 %v194, 1e-05
    %v196 = vrsqrt.pop %v195
    %v197 = vld [vmem:[%s1] sm:$0xf]
    %v198 = vld [vmem:[%s1 + $0x4] sm:$0xf]
    %v199 = vld [vmem:[%s1 + $0x8] sm:$0xf]
    %v200 = vld [vmem:[%s1 + $0xc] sm:$0xf]
    %v201 = vld [vmem:[%s1 + $0x10] sm:$0xf]
    %v202 = vld [vmem:[%s1 + $0x14] sm:$0xf]
    %v203 = vld [vmem:[%s1 + $0x18] sm:$0xf]
    %v204 = vld [vmem:[%s1 + $0x1c] sm:$0xf]
    %v205 = vmul.f32 %v196, %v197
    %v206 = vmul.f32 %v196, %v198
    %v207 = vmul.f32 %v196, %v199
    %v208 = vmul.f32 %v196, %v200
    %v209 = vmul.f32 %v196, %v201
    %v210 = vmul.f32 %v196, %v202
    %v211 = vmul.f32 %v196, %v203
    %v212 = vmul.f32 %v196, %v204
    %v213 = vld [vmem:[%s2] sm:$0xf]
    %v214 = vld [vmem:[%s2 + $0x4] sm:$0xf]
    %v215 = vld [vmem:[%s2 + $0x8] sm:$0xf]
    %v216 = vld [vmem:[%s2 + $0xc] sm:$0xf]
    %v217 = vld [vmem:[%s2 + $0x10] sm:$0xf]
    %v218 = vld [vmem:[%s2 + $0x14] sm:$0xf]
    %v219 = vld [vmem:[%s2 + $0x18] sm:$0xf]
    %v220 = vld [vmem:[%s2 + $0x1c] sm:$0xf]
    %v221 = vmul.f32 %v191, %v205
    %v222 = vmul.f32 %v191, %v206
    %v223 = vmul.f32 %v191, %v207
    %v224 = vmul.f32 %v191, %v208
    %v225 = vmul.f32 %v191, %v209
    %v226 = vmul.f32 %v191, %v210
    %v227 = vmul.f32 %v191, %v211
    %v228 = vmul.f32 %v191, %v212
    %v229 = vsub.f32 %v213, %v221
    %v230 = vsub.f32 %v214, %v222
    %v231 = vsub.f32 %v215, %v223
    %v232 = vsub.f32 %v216, %v224
    %v233 = vsub.f32 %v217, %v225
    %v234 = vsub.f32 %v218, %v226
    %v235 = vsub.f32 %v219, %v227
    %v236 = vsub.f32 %v220, %v228
    %238 = vset.pattern.permute.xlu0 0
    %239 = vperm.xlu0 %238, %v205
    %v240 = vpop.permute.xlu0 %239
    %242 = vset.pattern.permute.xlu0 0
    %243 = vperm.xlu0 %242, %v206
    %v244 = vpop.permute.xlu0 %243
    %246 = vset.pattern.permute.xlu0 0
    %247 = vperm.xlu0 %246, %v207
    %v248 = vpop.permute.xlu0 %247
    %250 = vset.pattern.permute.xlu0 0
    %251 = vperm.xlu0 %250, %v208
    %v252 = vpop.permute.xlu0 %251
    %254 = vset.pattern.permute.xlu0 0
    %255 = vperm.xlu0 %254, %v209
    %v256 = vpop.permute.xlu0 %255
    %258 = vset.pattern.permute.xlu0 0
    %259 = vperm.xlu0 %258, %v210
    %v260 = vpop.permute.xlu0 %259
    %262 = vset.pattern.permute.xlu0 0
    %263 = vperm.xlu0 %262, %v211
    %v264 = vpop.permute.xlu0 %263
    %266 = vset.pattern.permute.xlu0 0
    %267 = vperm.xlu0 %266, %v212
    %v268 = vpop.permute.xlu0 %267
    %v270 = vunpack.c.l.s4 839922192
    %v271 = vunpack.c.0.s8 %v270
    %v272 = vlaneseq
    %v273 = vshrl.u32 %v272, 7
    %v274 = vsub.s32 %v271, %v273
    %v275 = vrot.slane %v240, %v274
    %v277 = vunpack.c.l.s4 839922192
    %v278 = vunpack.c.0.s8 %v277
    %v279 = vlaneseq
    %v280 = vshrl.u32 %v279, 7
    %v281 = vsub.s32 %v278, %v280
    %v282 = vrot.slane %v244, %v281
    %v284 = vunpack.c.l.s4 839922192
    %v285 = vunpack.c.0.s8 %v284
    %v286 = vlaneseq
    %v287 = vshrl.u32 %v286, 7
    %v288 = vsub.s32 %v285, %v287
    %v289 = vrot.slane %v248, %v288
    %v291 = vunpack.c.l.s4 839922192
    %v292 = vunpack.c.0.s8 %v291
    %v293 = vlaneseq
    %v294 = vshrl.u32 %v293, 7
    %v295 = vsub.s32 %v292, %v294
    %v296 = vrot.slane %v252, %v295
    %v298 = vunpack.c.l.s4 839922192
    %v299 = vunpack.c.0.s8 %v298
    %v300 = vlaneseq
    %v301 = vshrl.u32 %v300, 7
    %v302 = vsub.s32 %v299, %v301
    %v303 = vrot.slane %v256, %v302
    %v305 = vunpack.c.l.s4 839922192
    %v306 = vunpack.c.0.s8 %v305
    %v307 = vlaneseq
    %v308 = vshrl.u32 %v307, 7
    %v309 = vsub.s32 %v306, %v308
    %v310 = vrot.slane %v260, %v309
    %v312 = vunpack.c.l.s4 839922192
    %v313 = vunpack.c.0.s8 %v312
    %v314 = vlaneseq
    %v315 = vshrl.u32 %v314, 7
    %v316 = vsub.s32 %v313, %v315
    %v317 = vrot.slane %v264, %v316
    %v319 = vunpack.c.l.s4 839922192
    %v320 = vunpack.c.0.s8 %v319
    %v321 = vlaneseq
    %v322 = vshrl.u32 %v321, 7
    %v323 = vsub.s32 %v320, %v322
    %v324 = vrot.slane %v268, %v323
    %v333 = vmul.f32 %v15, %v275
    %v334 = vmul.f32 %v16, %v282
    %v335 = vmul.f32 %v17, %v289
    %v336 = vmul.f32 %v18, %v296
    %v337 = vmul.f32 %v19, %v303
    %v338 = vmul.f32 %v20, %v310
    %v339 = vmul.f32 %v21, %v317
    %v340 = vmul.f32 %v22, %v324
    %342 = vset.pattern.permute.xlu0 0
    %343 = vperm.xlu0 %342, %v229
    %v344 = vpop.permute.xlu0 %343
    %346 = vset.pattern.permute.xlu0 0
    %347 = vperm.xlu0 %346, %v230
    %v348 = vpop.permute.xlu0 %347
    %350 = vset.pattern.permute.xlu0 0
    %351 = vperm.xlu0 %350, %v231
    %v352 = vpop.permute.xlu0 %351
    %354 = vset.pattern.permute.xlu0 0
    %355 = vperm.xlu0 %354, %v232
    %v356 = vpop.permute.xlu0 %355
    %358 = vset.pattern.permute.xlu0 0
    %359 = vperm.xlu0 %358, %v233
    %v360 = vpop.permute.xlu0 %359
    %362 = vset.pattern.permute.xlu0 0
    %363 = vperm.xlu0 %362, %v234
    %v364 = vpop.permute.xlu0 %363
    %366 = vset.pattern.permute.xlu0 0
    %367 = vperm.xlu0 %366, %v235
    %v368 = vpop.permute.xlu0 %367
    %370 = vset.pattern.permute.xlu0 0
    %371 = vperm.xlu0 %370, %v236
    %v372 = vpop.permute.xlu0 %371
    %v374 = vunpack.c.l.s4 839922192
    %v375 = vunpack.c.0.s8 %v374
    %v376 = vlaneseq
    %v377 = vshrl.u32 %v376, 7
    %v378 = vsub.s32 %v375, %v377
    %v379 = vrot.slane %v344, %v378
    %v381 = vunpack.c.l.s4 839922192
    %v382 = vunpack.c.0.s8 %v381
    %v383 = vlaneseq
    %v384 = vshrl.u32 %v383, 7
    %v385 = vsub.s32 %v382, %v384
    %v386 = vrot.slane %v348, %v385
    %v388 = vunpack.c.l.s4 839922192
    %v389 = vunpack.c.0.s8 %v388
    %v390 = vlaneseq
    %v391 = vshrl.u32 %v390, 7
    %v392 = vsub.s32 %v389, %v391
    %v393 = vrot.slane %v352, %v392
    %v395 = vunpack.c.l.s4 839922192
    %v396 = vunpack.c.0.s8 %v395
    %v397 = vlaneseq
    %v398 = vshrl.u32 %v397, 7
    %v399 = vsub.s32 %v396, %v398
    %v400 = vrot.slane %v356, %v399
    %v402 = vunpack.c.l.s4 839922192
    %v403 = vunpack.c.0.s8 %v402
    %v404 = vlaneseq
    %v405 = vshrl.u32 %v404, 7
    %v406 = vsub.s32 %v403, %v405
    %v407 = vrot.slane %v360, %v406
    %v409 = vunpack.c.l.s4 839922192
    %v410 = vunpack.c.0.s8 %v409
    %v411 = vlaneseq
    %v412 = vshrl.u32 %v411, 7
    %v413 = vsub.s32 %v410, %v412
    %v414 = vrot.slane %v364, %v413
    %v416 = vunpack.c.l.s4 839922192
    %v417 = vunpack.c.0.s8 %v416
    %v418 = vlaneseq
    %v419 = vshrl.u32 %v418, 7
    %v420 = vsub.s32 %v417, %v419
    %v421 = vrot.slane %v368, %v420
    %v423 = vunpack.c.l.s4 839922192
    %v424 = vunpack.c.0.s8 %v423
    %v425 = vlaneseq
    %v426 = vshrl.u32 %v425, 7
    %v427 = vsub.s32 %v424, %v426
    %v428 = vrot.slane %v372, %v427
    %v437 = vadd.f32 %v333, %v379
    %v438 = vadd.f32 %v334, %v386
    %v439 = vadd.f32 %v335, %v393
    %v440 = vadd.f32 %v336, %v400
    %v441 = vadd.f32 %v337, %v407
    %v442 = vadd.f32 %v338, %v414
    %v443 = vadd.f32 %v339, %v421
    %v444 = vadd.f32 %v340, %v428
    %445 = vst [vmem:[#allocation2] sm:$0xff] %v437
    %446 = vst [vmem:[#allocation2 + $0x8] sm:$0xff] %v438
    %447 = vst [vmem:[#allocation2 + $0x10] sm:$0xff] %v439
    %448 = vst [vmem:[#allocation2 + $0x18] sm:$0xff] %v440
    %449 = vst [vmem:[#allocation2 + $0x20] sm:$0xff] %v441
    %450 = vst [vmem:[#allocation2 + $0x28] sm:$0xff] %v442
    %451 = vst [vmem:[#allocation2 + $0x30] sm:$0xff] %v443
    %452 = vst [vmem:[#allocation2 + $0x38] sm:$0xff] %v444
    // Predicated region
    $region14: #{tpu_custom_call.1} parent=1 // pred_check
      _
    $region15: #{tpu_custom_call.1} parent=1 // pred_check_branch
      %454 = sbr.rel (0) target = $region17
    $region16: #{tpu_custom_call.1} parent=1 // pred_region
      %s456 = ssub.s32 1024, 1024
      %457 = vsyncadd [#allocation3], %s456
      %s458 = sshll.u32 [#allocation2], 4
      %s459 = int_to_ptr.vmem [resolvable:$true] %s458
      %464 = dma.vmem_to_hbm [thread:$0]  %s459, 1024, %s3, [#allocation3], 128, 128, 8
    $region17: #{tpu_custom_call.1} parent=1 // pred_fallthru
      _
    // Predicated region
    $region18: #{tpu_custom_call.1} parent=1 // pred_check
      _
    $region19: #{tpu_custom_call.1} parent=1 // pred_check_branch
      %466 = sbr.rel (0) target = $region21
    $region20: #{tpu_custom_call.1} parent=1 // pred_region
      %467 = dma.done [#allocation3], 1024
    $region21: #{tpu_custom_call.1} parent=1 // pred_fallthru
      _
    %468 = vsyncpa [#allocation3], 1

</llo_original>
